<compile_context>
chip_gen: v6e
topology: v6e:2x2x1
jax: 0.10.0
libtpu: 0.0.40
codegen_flags: <defaults>
</compile_context>

<pallas_src>
import functools

import jax
import jax.numpy as jnp
from jax.experimental import pallas as pl
from jax.experimental.pallas import tpu as pltpu


def _swisht_kernel(beta_ref, x_ref, o_ref, *, alpha):
    # beta_ref: SMEM scalar (shape (1,), f32); x_ref/o_ref: VMEM tiles.
    beta = beta_ref[0]
    x = x_ref[...].astype(jnp.float32)          # keep math in f32 vregs
    # Exact identity: sigmoid(z) == 0.5 * (1 + tanh(z/2))
    #   => x * sigmoid(beta*x) == 0.5 * x * (1 + tanh(0.5*beta*x))
    # Both transcendentals are native EUP tanh (no exp / divide).
    swish = 0.5 * x * (1.0 + jnp.tanh((0.5 * beta) * x))
    y = swish + alpha * jnp.tanh(x)
    o_ref[...] = y.astype(o_ref.dtype)


def swisht(x, beta, alpha=0.1, *, lane=1024, block_rows=2048):
    """SwishT forward: x * sigmoid(beta*x) + alpha*tanh(x).

    Args:
      x: jnp array (any shape, e.g. NCHW).
      beta: array of shape (1,) -- the learnable scalar parameter.
      alpha: python float constant.
      lane: lane-dense inner width (multiple of 128).
      block_rows: rows per pipelined block (multiple of 8); 2048 -> 8 MiB f32.
    """
    orig_shape = x.shape
    orig_dtype = x.dtype
    total = int(x.size)
    if total == 0:
        return x

    flat = x.reshape(-1)                       # metadata-only under jit
    beta_s = jnp.asarray(beta, jnp.float32).reshape((1,))

    if total % lane == 0:
        # Common case: lane-dense 2-D slab, full-width (unmasked) vector stores.
        rows = total // lane
        arr = flat.reshape(rows, lane)
        if rows <= block_rows:
            br, grid = rows, 1                 # single full-dim block
        else:
            br, grid = block_rows, pl.cdiv(rows, block_rows)  # ragged last
        block_shape = (br, lane)
        index_map = lambda i: (i, 0)
        out_shape = jax.ShapeDtypeStruct((rows, lane), orig_dtype)
    else:
        # Sub-lane ragged total: block the flat 1-D array directly; the final
        # partial block's OOB writes are masked by Pallas (no pad / no slice).
        arr = flat
        block_elems = block_rows * lane
        if total <= block_elems:
            be, grid = total, 1                # full-array block (always legal)
        else:
            be, grid = block_elems, pl.cdiv(total, block_elems)
        block_shape = (be,)
        index_map = lambda i: (i,)
        out_shape = jax.ShapeDtypeStruct((total,), orig_dtype)

    kernel = functools.partial(_swisht_kernel, alpha=float(alpha))

    out = pl.pallas_call(
        kernel,
        out_shape=out_shape,
        grid=(grid,),
        in_specs=[
            # beta: scalar parameter in SMEM, untiled across the grid.
            pl.BlockSpec(memory_space=pltpu.MemorySpace.SMEM),
            pl.BlockSpec(block_shape, index_map),
        ],
        out_specs=pl.BlockSpec(block_shape, index_map),
        # y has the same shape/dtype as x: reuse its HBM buffer when donatable
        # (donate x at the caller's jit boundary for the full benefit).
        input_output_aliases={1: 0},
        compiler_params=pltpu.CompilerParams(
            # "parallel" lets the runtime shard the streaming loop across
            # v7x's 2 TensorCores; neutral on v5e/v6e (single TC).
            dimension_semantics=("parallel",),
            # 2 in-bufs + 2 out-bufs * 8 MiB = 32 MiB (+ headroom); fits v7x's
            # 64 MiB physical VMEM and clears v5e's 16 MiB scoped default.
            vmem_limit_bytes=40 * 1024 * 1024,
        ),
    )(beta_s, arr)

    return out.reshape(orig_shape)


def swisht_reference(x, beta, alpha=0.1):
    return x * jax.nn.sigmoid(beta[0] * x) + alpha * jnp.tanh(x)


if __name__ == "__main__":
    key = jax.random.PRNGKey(0)

    # Parameter init matching the PyTorch module: beta = [1.0], alpha = 0.1.
    beta = jnp.array([1.0], dtype=jnp.float32)
    alpha = 0.1

    # 1) Main NCHW test (total is a multiple of 1024 -> 2-D lane-dense path).
    x = jax.random.normal(key, (2, 4, 16, 16), dtype=jnp.float32)
    ref = swisht_reference(x, beta, alpha)                 # computed first
    out = jax.block_until_ready(swisht(x, beta, alpha))
    assert out.shape == x.shape and out.dtype == x.dtype
    assert jnp.allclose(out, ref, atol=1e-4, rtol=1e-4), "mismatch (2-D path)"

    # 2) Ragged total (not a multiple of 1024) -> 1-D path, no pad/slice.
    x2 = jax.random.normal(jax.random.PRNGKey(1), (3, 5, 7, 11), dtype=jnp.float32)
    ref2 = swisht_reference(x2, beta, alpha)
    out2 = jax.block_until_ready(swisht(x2, beta, alpha))
    assert out2.shape == x2.shape
    assert jnp.allclose(out2, ref2, atol=1e-4, rtol=1e-4), "mismatch (1-D path)"

    # 3) Multi-block grid with a ragged last row-block (rows=40, block_rows=16)
    #    -> exercises Pallas' masked OOB writes instead of padding.
    x3 = jax.random.normal(jax.random.PRNGKey(2), (1, 8, 40, 128), dtype=jnp.float32)
    ref3 = swisht_reference(x3, beta, alpha)
    out3 = jax.block_until_ready(swisht(x3, beta, alpha, block_rows=16))
    assert out3.shape == x3.shape
    assert jnp.allclose(out3, ref3, atol=1e-4, rtol=1e-4), "mismatch (ragged rows)"

    print("KERNEL_OK")
</pallas_src>

<mosaic_0001>
module attributes {stable_mosaic.version = 11 : i64} {
  func.func @_swisht_kernel(%arg0: i32, %arg1: memref<1xf32, #tpu.memory_space<smem>>, %arg2: memref<2x1024xf32, #tpu.memory_space<vmem>>, %arg3: memref<2x1024xf32, #tpu.memory_space<vmem>>) attributes {dimension_semantics = [#tpu.dimension_semantics<parallel>], iteration_bounds = array<i64: 1>, scalar_prefetch = 0 : i64, scratch_operands = 0 : i64, tpu.core_type = #tpu.core_type<tc>, window_params = [{transform_indices = @transform_0, window_bounds = array<i64: 1>}, {transform_indices = @transform_1, window_bounds = array<i64: 2, 1024>}, {transform_indices = @transform_2, window_bounds = array<i64: 2, 1024>}]} {
    %c0 = arith.constant 0 : index
    %0 = memref.load %arg1[%c0] : memref<1xf32, #tpu.memory_space<smem>>
    %c0_0 = arith.constant 0 : index
    %c0_1 = arith.constant 0 : index
    %1 = vector.load %arg2[%c0_0, %c0_1] : memref<2x1024xf32, #tpu.memory_space<vmem>>, vector<2x1024xf32>
    %cst = arith.constant 5.000000e-01 : f32
    %2 = vector.broadcast %cst : f32 to vector<2x1024xf32>
    %3 = arith.mulf %2, %1 : vector<2x1024xf32>
    %cst_2 = arith.constant 5.000000e-01 : f32
    %4 = arith.mulf %cst_2, %0 : f32
    %5 = vector.broadcast %4 : f32 to vector<2x1024xf32>
    %6 = arith.mulf %5, %1 : vector<2x1024xf32>
    %7 = math.tanh %6 : vector<2x1024xf32>
    %cst_3 = arith.constant 1.000000e+00 : f32
    %8 = vector.broadcast %cst_3 : f32 to vector<2x1024xf32>
    %9 = arith.addf %8, %7 : vector<2x1024xf32>
    %10 = arith.mulf %3, %9 : vector<2x1024xf32>
    %11 = math.tanh %1 : vector<2x1024xf32>
    %cst_4 = arith.constant 1.000000e-01 : f32
    %12 = vector.broadcast %cst_4 : f32 to vector<2x1024xf32>
    %13 = arith.mulf %12, %11 : vector<2x1024xf32>
    %14 = arith.addf %10, %13 : vector<2x1024xf32>
    %c0_5 = arith.constant 0 : index
    %c0_6 = arith.constant 0 : index
    %15 = vector.load %arg3[%c0_5, %c0_6] : memref<2x1024xf32, #tpu.memory_space<vmem>>, vector<2x1024xf32>
    tpu.vector_store %arg3[%c0_5, %c0_6], %14 {strides = array<i32>} : memref<2x1024xf32, #tpu.memory_space<vmem>>, vector<2x1024xf32>,
    return
  }
  func.func @transform_0(%arg0: i32) -> i32 {
    %c0_i32 = arith.constant 0 : i32
    %c0_i32_0 = arith.constant 0 : i32
    return %c0_i32 : i32
  }
  func.func @transform_1(%arg0: i32) -> (i32, i32) {
    %c0_i32 = arith.constant 0 : i32
    %c0_i32_0 = arith.constant 0 : i32
    return %arg0, %c0_i32 : i32, i32
  }
  func.func @transform_2(%arg0: i32) -> (i32, i32) {
    %c0_i32 = arith.constant 0 : i32
    %c0_i32_0 = arith.constant 0 : i32
    return %arg0, %c0_i32 : i32, i32
  }
}

</mosaic_0001>

<llo_original>
// kernel: tpu_custom_call.1
$region0: #{tpu_custom_call.1}
  #allocation0 [shape = 'u32[]', space=smem, size = 0x4, offset = 0x4, fixed_abs, tag = 'smem constant byte address 0x4 - core index']
  #allocation1 [shape = 'u32[144,128]{1,0:T(1,128)}', space=vmem, size = 0x12000, scoped, tag = 'internal scratch']
  #allocation2 [shape = 'f32[1]{0:T(128)S(6)}', space=smem, size = 0x200, scoped, tag = 'scoped memory for tpu_custom_call.1']
  %s0 = inlined_call_operand.<no memory space> [shape: f32[1], index: 0, kind: input, shape index: {}]
  %s1 = inlined_call_operand.hbm [shape: f32[2,1024], index: 1, kind: input, shape index: {}, may-alias: {1,2}]
  %s2 = inlined_call_operand.hbm [shape: f32[2,1024], index: 2, kind: output, shape index: {}, may-alias: {1,2}]
  %s3 = sld [smem:[#allocation0]]
  $region22: #{tpu_custom_call.1} parent=0
    _
  %s5 = ssub.s32 1, %s3
  %s6 = scalar_select 0, %s5, %s3
  %7 = sst [smem:[#allocation2]] %s0
  $region1: #{tpu_custom_call.1} parent=0
    #allocation3 [shape = 'u8[8192]{0}', space=vmem, size = 0x2000, scoped, tag = 'input window, operand 1, single buffered']
    #allocation4 [shape = 's32[1]{0}', space=sflag, size = 0x4, scoped, tag = 'scoped memory for tpu_custom_call.1']
    #allocation5 [shape = 's32[1]{0}', space=sflag, size = 0x4, scoped, tag = 'scoped memory for tpu_custom_call.1']
    #allocation6 [shape = 'u8[8192]{0}', space=vmem, size = 0x2000, scoped, tag = 'output window, operand 0, single buffered']
    %8 = vsyncpa [#allocation4], 0
    %9 = vsyncpa [#allocation5], 0
    // Predicated region
    $region2: #{tpu_custom_call.1} parent=1 // pred_check
      _
    $region3: #{tpu_custom_call.1} parent=1 // pred_check_branch
      %11 = sbr.rel (0) target = $region5
    $region4: #{tpu_custom_call.1} parent=1 // pred_region
      _
    $region5: #{tpu_custom_call.1} parent=1 // pred_fallthru
      _
    // Predicated region
    $region6: #{tpu_custom_call.1} parent=1 // pred_check
      _
    $region7: #{tpu_custom_call.1} parent=1 // pred_check_branch
      %13 = sbr.rel (0) target = $region9
    $region8: #{tpu_custom_call.1} parent=1 // pred_region
      %s15 = ssub.s32 256, 256
      %16 = vsyncadd [#allocation4], %s15
      %s18 = sshll.u32 [#allocation3], 4
      %s19 = int_to_ptr.vmem [resolvable:$true] %s18
      %21 = dma.hbm_to_vmem [thread:$0]  %s1, 256, %s19, [#allocation4]
    $region9: #{tpu_custom_call.1} parent=1 // pred_fallthru
      _
    // Predicated region
    $region10: #{tpu_custom_call.1} parent=1 // pred_check
      _
    $region11: #{tpu_custom_call.1} parent=1 // pred_check_branch
      %23 = sbr.rel (0) target = $region13
    $region12: #{tpu_custom_call.1} parent=1 // pred_region
      %24 = dma.done [#allocation4], 256
    $region13: #{tpu_custom_call.1} parent=1 // pred_fallthru
      _
    %s25 = sld [smem:[#allocation2]]
    %v26 = vld [vmem:[#allocation3] sm:$0xff]
    %v27 = vld [vmem:[#allocation3 + $0x8] sm:$0xff]
    %v28 = vmul.f32 %v26, 0.5
    %v29 = vmul.f32 %v27, 0.5
    %s30 = smul.f32 %s25, 0.5
    %v31 = vstv %s30
    %v32 = vmul.f32 %v31, %v26
    %v33 = vmul.f32 %v31, %v27
    %v34 = vtanh.pop %v32
    %v35 = vtanh.pop %v33
    %v36 = vadd.f32 %v34, 1.0
    %v37 = vadd.f32 %v35, 1.0
    %v38 = vmul.f32 %v28, %v36
    %v39 = vmul.f32 %v29, %v37
    %v40 = vtanh.pop %v26
    %v41 = vtanh.pop %v27
    %v42 = vmul.f32 %v40, 0.1
    %v43 = vmul.f32 %v41, 0.1
    %v44 = vadd.f32 %v38, %v42
    %v45 = vadd.f32 %v39, %v43
    %46 = vst [vmem:[#allocation6] sm:$0xff] %v44
    %47 = vst [vmem:[#allocation6 + $0x8] sm:$0xff] %v45
    // Predicated region
    $region14: #{tpu_custom_call.1} parent=1 // pred_check
      _
    $region15: #{tpu_custom_call.1} parent=1 // pred_check_branch
      %49 = sbr.rel (0) target = $region17
    $region16: #{tpu_custom_call.1} parent=1 // pred_region
      %s51 = ssub.s32 256, 256
      %52 = vsyncadd [#allocation5], %s51
      %s54 = sshll.u32 [#allocation6], 4
      %s55 = int_to_ptr.vmem [resolvable:$true] %s54
      %57 = dma.vmem_to_hbm [thread:$0]  %s55, 256, %s2, [#allocation5]
    $region17: #{tpu_custom_call.1} parent=1 // pred_fallthru
      _
    // Predicated region
    $region18: #{tpu_custom_call.1} parent=1 // pred_check
      _
    $region19: #{tpu_custom_call.1} parent=1 // pred_check_branch
      %59 = sbr.rel (0) target = $region21
    $region20: #{tpu_custom_call.1} parent=1 // pred_region
      %60 = dma.done [#allocation5], 256
    $region21: #{tpu_custom_call.1} parent=1 // pred_fallthru
      _
    %61 = vsyncpa [#allocation4], 1
    %62 = vsyncpa [#allocation5], 1

</llo_original>
